<compile_context>
chip_gen: v7x
topology: tpu7x:2x2x1
jax: 0.10.0
libtpu: 0.0.40
codegen_flags: <defaults>
</compile_context>

<pallas_src>
import jax
import jax.numpy as jnp
from jax.experimental import pallas as pl
from jax.experimental.pallas import tpu as pltpu

_LANE = 128
_MIN_GRID_STEPS = 4  # >= 2 blocks per TensorCore on v7x megacore
_WIDE_COLS = (4096, 2048, 1024, 512, 256)  # wider lane-dense slab when it divides n


def _sigmoid_kernel(x_ref, o_ref):
    # Compute in f32 (v5e VPU/EUP have no bf16 path), cast back on store.
    x = x_ref[...].astype(jnp.float32)
    e = jnp.exp(-x)                           # EUP; hidden under DMA (mem-bound)
    y = pl.reciprocal(1.0 + e, approx=False)  # exact, matches 1/(1+exp(-x)) to 1e-6
    o_ref[...] = y.astype(o_ref.dtype)


def _round_up(v: int, m: int) -> int:
    return -(-v // m) * m


def _select_tuning():
    """Per-generation (block bytes, scoped VMEM limit) choice."""
    target_block_bytes = 4 << 20   # safe default on every generation
    vmem_limit_bytes = 32 << 20
    try:
        vmem = getattr(pltpu.get_tpu_info(), "vmem_capacity_bytes", 0)
        if vmem >= (100 << 20):        # v5e / v6e: 128 MiB VMEM -> bigger blocks
            target_block_bytes = 8 << 20
            vmem_limit_bytes = 64 << 20
        elif vmem > 0:                 # v7x: 64 MiB VMEM per TC -> stay ~4-6 MiB
            target_block_bytes = 5 << 20
            vmem_limit_bytes = 48 << 20
    except Exception:
        pass
    return target_block_bytes, vmem_limit_bytes


def _pick_tile_rows(rows, row_align, cols, itemsize, target_block_bytes):
    """Rows per block: a multiple of row_align, roughly target_block_bytes, and
    (when the tensor is large enough) at least _MIN_GRID_STEPS grid steps.  No
    divisibility requirement on `rows` — the cdiv grid's last block is masked."""
    if rows <= row_align:
        return rows                           # single block == full array dims
    cap = max(row_align, target_block_bytes // (cols * itemsize))
    cap -= cap % row_align
    if rows >= _MIN_GRID_STEPS * row_align:
        per_step = _round_up(-(-rows // _MIN_GRID_STEPS), row_align)
        cap = min(cap, per_step)
    return min(cap, _round_up(rows, row_align))


def sigmoid(x: jax.Array) -> jax.Array:
    """Elementwise sigmoid matching `1.0 / (1.0 + torch.exp(-x))`."""
    orig_shape = x.shape
    dtype = x.dtype
    itemsize = jnp.dtype(dtype).itemsize
    # Sublane packing: 8 rows per vreg for 4-byte, 16 for 2-byte, 32 for 1-byte.
    row_align = 8 * max(1, 4 // itemsize)

    flat = x.reshape(-1)
    n = flat.shape[0]

    needs_pad = (n % _LANE) != 0
    if needs_pad:
        # TODO(synk): unaligned-n fallback still pays one XLA pad + slice HBM
        # pass; a fully in-kernel masked tail would need a 1-D lane layout.
        flat = jnp.pad(flat, (0, (-n) % _LANE))

    n_padded = flat.shape[0]
    cols = _LANE
    for c in _WIDE_COLS:  # free layout plumbing: wider lane-dense slab if possible
        if n_padded % c == 0:
            cols = c
            break
    rows = n_padded // cols
    x2d = flat.reshape(rows, cols)

    target_block_bytes, vmem_limit_bytes = _select_tuning()
    tile_rows = _pick_tile_rows(rows, row_align, cols, itemsize, target_block_bytes)
    grid = (pl.cdiv(rows, tile_rows),)

    out2d = pl.pallas_call(
        _sigmoid_kernel,
        out_shape=jax.ShapeDtypeStruct((rows, cols), dtype),
        grid_spec=pltpu.PrefetchScalarGridSpec(
            num_scalar_prefetch=0,
            grid=grid,
            in_specs=[pl.BlockSpec((tile_rows, cols), lambda i: (i, 0))],
            out_specs=pl.BlockSpec((tile_rows, cols), lambda i: (i, 0)),
        ),
        compiler_params=pltpu.CompilerParams(
            dimension_semantics=("parallel",),
            # in + out, double-buffered, at the chosen block size stays well
            # inside the scoped limit on every generation.
            vmem_limit_bytes=vmem_limit_bytes,
        ),
    )(x2d)

    if needs_pad:
        return out2d.reshape(-1)[:n].reshape(orig_shape)
    return out2d.reshape(orig_shape)


if __name__ == "__main__":
    key = jax.random.PRNGKey(0)
    # NCHW input, small shapes: batch=2, channels=4, spatial=16x16
    x = jax.random.normal(key, (2, 4, 16, 16), dtype=jnp.float32)
    # mirror the preprocessing line in the lesson script: x = x / 16.0
    x = x / 16.0

    y = jax.block_until_ready(sigmoid(x))

    # sanity check against plain-JAX reference of the module's exact formula
    y_ref = 1.0 / (1.0 + jnp.exp(-x))
    assert y.shape == x.shape and y.dtype == x.dtype
    assert jnp.max(jnp.abs(y - y_ref)) < 1e-6

    print("KERNEL_OK")
</pallas_src>

<mosaic_0001>
module attributes {stable_mosaic.version = 11 : i64} {
  func.func @_sigmoid_kernel(%arg0: i32, %arg1: memref<1x2048xf32, #tpu.memory_space<vmem>>, %arg2: memref<1x2048xf32, #tpu.memory_space<vmem>>) attributes {dimension_semantics = [#tpu.dimension_semantics<parallel>], iteration_bounds = array<i64: 1>, scalar_prefetch = 0 : i64, scratch_operands = 0 : i64, tpu.core_type = #tpu.core_type<tc>, window_params = [{transform_indices = @transform_0, window_bounds = array<i64: 1, 2048>}, {transform_indices = @transform_1, window_bounds = array<i64: 1, 2048>}]} {
    %c0 = arith.constant 0 : index
    %c0_0 = arith.constant 0 : index
    %0 = vector.load %arg1[%c0, %c0_0] : memref<1x2048xf32, #tpu.memory_space<vmem>>, vector<1x2048xf32>
    %cst = arith.constant 0.000000e+00 : f32
    %1 = vector.broadcast %cst : f32 to vector<1x2048xf32>
    %2 = arith.subf %1, %0 : vector<1x2048xf32>
    %3 = math.exp %2 : vector<1x2048xf32>
    %cst_1 = arith.constant 1.000000e+00 : f32
    %4 = vector.broadcast %cst_1 : f32 to vector<1x2048xf32>
    %5 = arith.addf %4, %3 : vector<1x2048xf32>
    %6 = tpu.reciprocal %5 : vector<1x2048xf32> -> vector<1x2048xf32>
    %c0_2 = arith.constant 0 : index
    %c0_3 = arith.constant 0 : index
    %7 = vector.load %arg2[%c0_2, %c0_3] : memref<1x2048xf32, #tpu.memory_space<vmem>>, vector<1x2048xf32>
    tpu.vector_store %arg2[%c0_2, %c0_3], %6 {strides = array<i32>} : memref<1x2048xf32, #tpu.memory_space<vmem>>, vector<1x2048xf32>,
    return
  }
  func.func @transform_0(%arg0: i32) -> (i32, i32) {
    %c0_i32 = arith.constant 0 : i32
    %c0_i32_0 = arith.constant 0 : i32
    return %arg0, %c0_i32 : i32, i32
  }
  func.func @transform_1(%arg0: i32) -> (i32, i32) {
    %c0_i32 = arith.constant 0 : i32
    %c0_i32_0 = arith.constant 0 : i32
    return %arg0, %c0_i32 : i32, i32
  }
}

</mosaic_0001>

<llo_original>
// kernel: tpu_custom_call.1
$region0: #{tpu_custom_call.1}
  #allocation0 [shape = 'u32[]', space=smem, size = 0x4, offset = 0x4, fixed_abs, tag = 'smem constant byte address 0x4 - core index']
  #allocation1 [shape = 'u32[144,128]{1,0:T(1,128)}', space=vmem, size = 0x12000, scoped, tag = 'internal scratch']
  %s0 = inlined_call_operand.hbm [shape: f32[1,2048], index: 0, kind: input, shape index: {}]
  %s1 = inlined_call_operand.hbm [shape: f32[1,2048], index: 1, kind: output, shape index: {}]
  %s2 = sld [smem:[#allocation0]]
  $region18: #{tpu_custom_call.1} parent=0
    _
  %s4 = ssub.s32 1, %s2
  %s5 = scalar_select 0, %s4, %s2
  $region1: #{tpu_custom_call.1} parent=0
    #allocation2 [shape = 'u8[8192]{0}', space=vmem, size = 0x2000, scoped, tag = 'input window, operand 0, single buffered']
    #allocation3 [shape = 's32[1]{0}', space=sflag, size = 0x4, scoped, tag = 'scoped memory for tpu_custom_call.1']
    #allocation4 [shape = 's32[1]{0}', space=sflag, size = 0x4, scoped, tag = 'scoped memory for tpu_custom_call.1']
    #allocation5 [shape = 'u8[8192]{0}', space=vmem, size = 0x2000, scoped, tag = 'output window, operand 0, single buffered']
    %6 = vsyncpa [#allocation3], 0
    %7 = vsyncpa [#allocation4], 0
    // Predicated region
    $region2: #{tpu_custom_call.1} parent=1 // pred_check
      _
    $region3: #{tpu_custom_call.1} parent=1 // pred_check_branch
      %9 = sbr.rel (0) target = $region5
    $region4: #{tpu_custom_call.1} parent=1 // pred_region
      %s11 = ssub.s32 256, 256
      %12 = vsyncadd [#allocation3], %s11
      %s14 = sshll.u32 [#allocation2], 4
      %s15 = int_to_ptr.vmem [resolvable:$true] %s14
      %17 = dma.hbm_to_vmem [thread:$0]  %s0, 256, %s15, [#allocation3]
    $region5: #{tpu_custom_call.1} parent=1 // pred_fallthru
      _
    // Predicated region
    $region6: #{tpu_custom_call.1} parent=1 // pred_check
      _
    $region7: #{tpu_custom_call.1} parent=1 // pred_check_branch
      %19 = sbr.rel (0) target = $region9
    $region8: #{tpu_custom_call.1} parent=1 // pred_region
      %20 = dma.done [#allocation3], 256
    $region9: #{tpu_custom_call.1} parent=1 // pred_fallthru
      _
    %v21 = vld [vmem:[#allocation2] sm:$0xff]
    %v22 = vld [vmem:[#allocation2 + $0x8] sm:$0xff]
    %v23 = vsub.f32 0.0, %v21
    %v24 = vsub.f32 0.0, %v22
    %v25 = vmul.f32 %v23, 1.442695
    %v26 = vpow.pop %v25
    %v27 = vmul.f32 %v24, 1.442695
    %v28 = vpow.pop %v27
    %v29 = vadd.f32 %v26, 1.0
    %v30 = vadd.f32 %v28, 1.0
    %v31 = vrcp.pop %v29
    %v32 = vrcp.pop %v30
    %33 = vst [vmem:[#allocation5] sm:$0xff] %v31
    %34 = vst [vmem:[#allocation5 + $0x8] sm:$0xff] %v32
    // Predicated region
    $region10: #{tpu_custom_call.1} parent=1 // pred_check
      _
    $region11: #{tpu_custom_call.1} parent=1 // pred_check_branch
      %36 = sbr.rel (0) target = $region13
    $region12: #{tpu_custom_call.1} parent=1 // pred_region
      %s38 = ssub.s32 256, 256
      %39 = vsyncadd [#allocation4], %s38
      %s41 = sshll.u32 [#allocation5], 4
      %s42 = int_to_ptr.vmem [resolvable:$true] %s41
      %44 = dma.vmem_to_hbm [thread:$0]  %s42, 256, %s1, [#allocation4]
    $region13: #{tpu_custom_call.1} parent=1 // pred_fallthru
      _
    // Predicated region
    $region14: #{tpu_custom_call.1} parent=1 // pred_check
      _
    $region15: #{tpu_custom_call.1} parent=1 // pred_check_branch
      %46 = sbr.rel (0) target = $region17
    $region16: #{tpu_custom_call.1} parent=1 // pred_region
      %47 = dma.done [#allocation4], 256
    $region17: #{tpu_custom_call.1} parent=1 // pred_fallthru
      _
    %48 = vsyncpa [#allocation3], 1
    %49 = vsyncpa [#allocation4], 1

</llo_original>
